<compile_context>
chip_gen: v5e
topology: v5e:2x2
jax: 0.10.0
libtpu: 0.0.40
codegen_flags: <defaults>
</compile_context>

<pallas_src>
import functools

import jax
import jax.numpy as jnp
import numpy as np
from jax import lax
from jax.experimental import pallas as pl
from jax.experimental.pallas import tpu as pltpu

NEG_SLOPE = 0.01          # nn.LeakyReLU() default negative_slope
_SMALL_C_MAX = 32         # below this channel count, use the lane-dense VPU path
_LANE = 128


def _cdiv(a, b):
    return -(-a // b)


def _round_up(x, m):
    return _cdiv(x, m) * m


def _vmem_capacity_bytes():
    """Physical VMEM of the attached TPU; falls back to the smallest (v7x)."""
    try:
        info = pltpu.get_tpu_info()
        return int(getattr(info, "vmem_capacity_bytes", 64 * 1024 * 1024))
    except Exception:
        return 64 * 1024 * 1024


def _pick_row_tile(ho, n_batch, per_row_bytes, resident_bytes, vmem_cap):
    """Output rows per grid step: the biggest multiple of 8 whose double-buffered
    footprint fits a generation-aware budget, keeping >= 2 grid programs when
    possible (v7x shards 'parallel' grid axes over its 2 TensorCores)."""
    budget = (12 if vmem_cap >= 100 * 2**20 else 6) * 2**20
    avail = max(budget - resident_bytes, 2**20)
    t = int(avail // max(per_row_bytes, 1))
    t = max(8, min(t - (t % 8), 1024))
    t = min(t, max(8, (ho // 8) * 8))             # do not exceed the work available
    if n_batch * _cdiv(ho, t) < 2 and ho > 8:     # feed both v7x TensorCores
        t = max(8, _round_up(_cdiv(ho, 2), 8))
    return t


# -----------------------------------------------------------------------------
# Kernels
# -----------------------------------------------------------------------------
def _down_sample_small_c_kernel(wv_ref, xs_ref, halo_ref, o_ref):
    # wv_ref  : (3, S, W*C)     per-lane-shift weight vectors (f32, VMEM-resident)
    # xs_ref  : (1, T, 2*Wp*C)  T "super rows"; super row r = padded rows (2r, 2r+1)
    # halo_ref: (1, 1, 1, 2*Wp*C)  super row following the block (bottom halo)
    # o_ref   : (1, T, W*C)     lane-dense NHWC output rows
    T = xs_ref.shape[1]
    Lh = xs_ref.shape[2] // 2           # one padded row = Wp*C lanes
    Lout = o_ref.shape[2]               # W*C output lanes
    S = wv_ref.shape[1]                 # 4*C - 1 distinct lane shifts

    xm = xs_ref[0].astype(jnp.float32)                 # (T, 2*Lh)
    halo = halo_ref[0, 0].astype(jnp.float32)          # (1, 2*Lh)
    xn = jnp.concatenate([xm[1:], halo], axis=0)       # next super row per output row

    acc = jnp.zeros((T, Lout), jnp.float32)
    for j in range(S):                  # static, unrolled loop over lane shifts
        k = j + 1
        w0 = wv_ref[0, j:j + 1, :]      # (1, Lout)  kh = 0  (padded row 2r)
        w1 = wv_ref[1, j:j + 1, :]      #            kh = 1  (padded row 2r + 1)
        w2 = wv_ref[2, j:j + 1, :]      #            kh = 2  (padded row 2r + 2)
        acc += xm[:, k:k + Lout] * w0
        acc += xm[:, Lh + k:Lh + k + Lout] * w1
        acc += xn[:, k:k + Lout] * w2

    y = jnp.where(acc >= 0, acc, NEG_SLOPE * acc)       # LeakyReLU in f32
    o_ref[0] = y.astype(o_ref.dtype)                    # lane-dense store


def _down_sample_mxu_kernel(wk_ref, x_ref, halo_ref, o_ref):
    # wk_ref  : (3, 3, C, C)   weights [kh, kw, ci, co], VMEM-resident
    # x_ref   : (1, 2T, Wp, C) padded rows [2*T*t, 2*T*t + 2*T)
    # halo_ref: (1, 1, Wp, C)  padded row 2*T*(t+1)
    # o_ref   : (1, T, W, C)   channels-minor NHWC output rows (lane-dense for C>=128)
    _, T, W, C = o_ref.shape
    Wp = x_ref.shape[2]

    x = x_ref[0]                                        # (2T, Wp, C)
    xr = x.reshape(T, 2, Wp, C)
    r0 = xr[:, 0]                                       # rows 2*ho      (kh = 0)
    r1 = xr[:, 1]                                       # rows 2*ho + 1  (kh = 1)
    r2 = jnp.concatenate([r0[1:], halo_ref[0]], axis=0)  # rows 2*ho + 2  (kh = 2)

    acc = jnp.zeros((T * W, C), jnp.float32)
    for kh, rows in enumerate((r0, r1, r2)):
        for kw in range(3):
            # TODO(synk): a pltpu.roll-based tap (sublane rotate on the XLU) would
            # avoid the relayout copies these width-window slices imply.
            taps = rows[:, 1 + kw:1 + kw + W, :].reshape(T * W, C)
            acc += jnp.dot(taps, wk_ref[kh, kw],
                           preferred_element_type=jnp.float32)

    y = jnp.where(acc >= 0, acc, NEG_SLOPE * acc)
    o_ref[0] = y.reshape(T, W, C).astype(o_ref.dtype)


# -----------------------------------------------------------------------------
# Host-side helpers (layout glue only; no per-tap HBM blow-up)
# -----------------------------------------------------------------------------
def prepare_down_sample_weight(weight_oihw, compute_dtype=jnp.float32):
    """(C_out, C_in, 3, 3) -> (kh, kw, C_in, C_out); do ONCE at load time."""
    return jnp.transpose(weight_oihw, (2, 3, 1, 0)).astype(compute_dtype)


def _small_c_weight_vectors(wk, w_out):
    """Repack (3, 3, C, C) weights into per-lane-shift vectors (3, 4C-1, W*C).

    Lane-dense layout: output lane l = w*C + co; the tap for (kw, ci) lives at
    input lane l + k with k = (1 + kw)*C + ci - co in [1, 4C-1] (thanks to the
    (2,2) column pad).  vec[kh, k-1, l] holds the weight multiplying input lane
    l + k (zero where no (kw, ci) maps to that shift)."""
    _, _, c, _ = wk.shape
    s = 4 * c - 1
    kw_idx = np.zeros((s, c), np.int32)
    ci_idx = np.zeros((s, c), np.int32)
    valid = np.zeros((s, c), np.float32)
    for j in range(s):
        k = j + 1
        for co in range(c):
            ci = (k + co) % c
            kw = (k + co - ci) // c - 1
            if 0 <= kw <= 2:
                kw_idx[j, co] = kw
                ci_idx[j, co] = ci
                valid[j, co] = 1.0
    pattern = wk.astype(jnp.float32)[:, kw_idx, ci_idx, np.arange(c)[None, :]]
    pattern = pattern * jnp.asarray(valid)[None]        # (3, S, C)
    return jnp.tile(pattern, (1, 1, w_out))              # (3, S, W*C)


def down_sample_nhwc(x_nhwc, wk, *, force_mxu=False):
    """Down_Sample forward in NHWC: reflect-padded 3x3 conv, stride (2, 1),
    no bias, then LeakyReLU(0.01).  (N, H, W, C) -> (N, Ho, W, C).

    The full backbone should stay NHWC end-to-end (and keep activations bf16 if
    a bf16 stream is wanted); the NCHW wrapper below is only a parity shim."""
    N, H, W, C = x_nhwc.shape
    assert wk.shape == (3, 3, C, C), wk.shape
    assert W >= 3 and H >= 2 and (H >= 3 or H % 2 == 0), \
        "this kernel's reflect padding needs W >= 3 and H >= 3 (or even H >= 2)"
    Ho = (H - 1) // 2 + 1
    compute_dtype = wk.dtype
    out_dtype = x_nhwc.dtype
    in_isz = jnp.dtype(compute_dtype).itemsize
    out_isz = jnp.dtype(out_dtype).itemsize
    vmem_cap = _vmem_capacity_bytes()

    # Single fused reflect-pad (+cast): rows (1, 1 [+1 so the row count is even]),
    # cols (2, 2) so every in-kernel tap is an in-bounds static slice.  This is
    # the only wrapper-side data movement (~1.2x of the input); the previous
    # version's three strided row views are gone.
    extra_row = H % 2
    x_pad = jnp.pad(x_nhwc.astype(compute_dtype),
                    ((0, 0), (1, 1 + extra_row), (2, 2), (0, 0)), mode="reflect")
    Hp, Wp = H + 2 + extra_row, W + 4

    lane_c = _round_up(C, _LANE)
    lane_out = _round_up(W * C, _LANE)
    lane_row = _round_up(2 * Wp * C, _LANE)

    small_c_resident = 3 * (4 * C - 1) * lane_out * 4
    use_small_c = (not force_mxu) and C < _SMALL_C_MAX and \
        small_c_resident <= 4 * 2**20

    if use_small_c:
        per_row = (2 * lane_row * in_isz            # main block (double buffered)
                   + 2 * lane_out * out_isz         # output block (double buffered)
                   + 2 * lane_row * 4               # f32 working copies (xm / xn)
                   + lane_out * 4)                  # f32 accumulator
        resident = small_c_resident + 2 * lane_row * in_isz
    else:
        per_row = (2 * 2 * Wp * lane_c * in_isz
                   + 2 * W * lane_c * out_isz
                   + 3 * Wp * lane_c * in_isz       # r0 / r1 / r2 working copies
                   + W * lane_c * 4)                # f32 accumulator
        resident = 9 * C * lane_c * in_isz + 2 * Wp * lane_c * in_isz

    T = _pick_row_tile(Ho, N, per_row, resident, vmem_cap)
    n_tiles = _cdiv(Ho, T)
    grid = (N, n_tiles)

    # Keep block dims <= array dims for tiny inputs: a few unused zero rows on
    # the input and an over-allocated output sliced back to Ho afterwards.
    if Hp < 2 * T:
        x_pad = jnp.pad(x_pad, ((0, 0), (0, 2 * T - Hp), (0, 0), (0, 0)))
        Hp = 2 * T
    ho_alloc = Ho if Ho >= T else T

    vmem_limit = int(min(0.85 * vmem_cap,
                         max(32 * 2**20, resident + T * per_row + 8 * 2**20)))
    cparams = pltpu.CompilerParams(
        dimension_semantics=("parallel", "parallel"),
        vmem_limit_bytes=vmem_limit)

    if use_small_c:
        # ------- lane-dense VPU path (early, small-C backbone stages) -------
        n_super = Hp // 2
        lrow = 2 * Wp * C
        lout = W * C
        x_super = x_pad.reshape(N, n_super, lrow)        # free metadata reshape
        halo_idx = np.minimum((np.arange(n_tiles) + 1) * T, n_super - 1)
        halo = x_super[:, halo_idx][:, :, None, :]        # (N, n_tiles, 1, lrow)
        wv = _small_c_weight_vectors(wk, W)                # (3, 4C-1, lout)

        out = pl.pallas_call(
            _down_sample_small_c_kernel,
            out_shape=jax.ShapeDtypeStruct((N, ho_alloc, lout), out_dtype),
            grid=grid,
            in_specs=[
                pl.BlockSpec((3, 4 * C - 1, lout), lambda n, t: (0, 0, 0)),
                pl.BlockSpec((1, T, lrow), lambda n, t: (n, t, 0)),
                pl.BlockSpec((1, 1, 1, lrow), lambda n, t: (n, t, 0, 0)),
            ],
            out_specs=pl.BlockSpec((1, T, lout), lambda n, t: (n, t, 0)),
            compiler_params=cparams,
        )(wv, x_super, halo)
        return out[:, :Ho].reshape(N, Ho, W, C)

    # ----------- channels-minor MXU path (deep, large-C stages) -----------
    halo_rows = np.minimum((np.arange(n_tiles) + 1) * 2 * T, Hp - 1)
    halo = x_pad[:, halo_rows]                             # (N, n_tiles, Wp, C)
    out = pl.pallas_call(
        _down_sample_mxu_kernel,
        out_shape=jax.ShapeDtypeStruct((N, ho_alloc, W, C), out_dtype),
        grid=grid,
        in_specs=[
            pl.BlockSpec((3, 3, C, C), lambda n, t: (0, 0, 0, 0)),
            pl.BlockSpec((1, 2 * T, Wp, C), lambda n, t: (n, t, 0, 0)),
            pl.BlockSpec((1, 1, Wp, C), lambda n, t: (n, t, 0, 0)),
        ],
        out_specs=pl.BlockSpec((1, T, W, C), lambda n, t: (n, t, 0, 0)),
        compiler_params=cparams,
    )(wk, x_pad, halo)
    return out[:, :Ho]


@functools.partial(jax.jit, static_argnames=("force_mxu",))
def down_sample_nchw(x_nchw, wk, force_mxu=False):
    """PyTorch-layout shim (NCHW in / NCHW out) used for the parity checks."""
    x_nhwc = jnp.transpose(x_nchw, (0, 2, 3, 1))
    y = down_sample_nhwc(x_nhwc, wk, force_mxu=force_mxu)
    return jnp.transpose(y, (0, 3, 1, 2))


def reference(x_nchw, weight_oihw):
    """Pure-JAX reference matching PyTorch Down_Sample semantics (fp32)."""
    x_pad = jnp.pad(x_nchw, ((0, 0), (0, 0), (1, 1), (1, 1)), mode="reflect")
    y = lax.conv_general_dilated(
        x_pad, weight_oihw, window_strides=(2, 1), padding="VALID",
        dimension_numbers=("NCHW", "OIHW", "NCHW"))
    return jnp.where(y >= 0, y, NEG_SLOPE * y)


if __name__ == "__main__":
    key = jax.random.PRNGKey(0)
    kx, kw_key, kx2, kx3 = jax.random.split(key, 4)

    # Small shapes consistent with the module: NCHW input, channel = 4.
    N, C, H, W = 2, 4, 16, 16
    x = jax.random.normal(kx, (N, C, H, W), dtype=jnp.float32)
    bound = 1.0 / (C * 3 * 3) ** 0.5
    w = jax.random.uniform(kw_key, (C, C, 3, 3), minval=-bound, maxval=bound,
                           dtype=jnp.float32)
    Ho = (H - 1) // 2 + 1
    y_ref = reference(x, w)
    wk_f32 = prepare_down_sample_weight(w, jnp.float32)

    # Small-C lane-dense VPU path (auto-selected for C=4): exact f32 parity.
    y_vpu = jax.block_until_ready(down_sample_nchw(x, wk_f32))
    assert y_vpu.shape == (N, C, Ho, W), y_vpu.shape
    assert jnp.allclose(y_vpu, y_ref, atol=1e-5, rtol=1e-5), "small-C path mismatch"

    # Channels-minor MXU path (used for the deep, large-C backbone stages).
    y_mxu = jax.block_until_ready(down_sample_nchw(x, wk_f32, force_mxu=True))
    assert jnp.allclose(y_mxu, y_ref, atol=1e-5, rtol=1e-5), "MXU path mismatch"

    # bf16 HBM stream (weights prepared in bf16 -> bf16 padded activations),
    # f32 accumulation.
    wk_bf16 = prepare_down_sample_weight(w, jnp.bfloat16)
    y_bf16 = jax.block_until_ready(down_sample_nchw(x, wk_bf16))
    assert jnp.allclose(y_bf16, y_ref, atol=5e-2, rtol=5e-2), "bf16 mismatch"

    # Odd H / ragged last row-tile (partial edge blocks + clamped halo).
    x2 = jax.random.normal(kx2, (1, C, 19, 12), dtype=jnp.float32)
    y2 = jax.block_until_ready(down_sample_nchw(x2, wk_f32))
    assert jnp.allclose(y2, reference(x2, w), atol=1e-5, rtol=1e-5), "ragged mismatch"

    # Tiny H (Ho < 8): over-allocated output rows + zero row extension.
    x3 = jax.random.normal(kx3, (1, C, 6, 16), dtype=jnp.float32)
    y3 = jax.block_until_ready(down_sample_nchw(x3, wk_f32))
    assert jnp.allclose(y3, reference(x3, w), atol=1e-5, rtol=1e-5), "tiny-H mismatch"

    print("KERNEL_OK")
</pallas_src>

<mosaic_0001>
module attributes {stable_mosaic.version = 11 : i64} {
  func.func @_down_sample_small_c_kernel(%arg0: i32, %arg1: i32, %arg2: memref<3x15x64xf32, #tpu.memory_space<vmem>>, %arg3: memref<1x8x160xf32, #tpu.memory_space<vmem>>, %arg4: memref<1x1x1x160xf32, #tpu.memory_space<vmem>>, %arg5: memref<1x8x64xf32, #tpu.memory_space<vmem>>) attributes {dimension_semantics = [#tpu.dimension_semantics<parallel>, #tpu.dimension_semantics<parallel>], iteration_bounds = array<i64: 2, 1>, scalar_prefetch = 0 : i64, scratch_operands = 0 : i64, tpu.core_type = #tpu.core_type<tc>, window_params = [{pipeline_mode = #tpu.pipeline_mode<synchronous>, transform_indices = @transform_0, window_bounds = array<i64: 3, 15, 64>}, {transform_indices = @transform_1, window_bounds = array<i64: 1, 8, 160>}, {transform_indices = @transform_2, window_bounds = array<i64: 1, 1, 1, 160>}, {transform_indices = @transform_3, window_bounds = array<i64: 1, 8, 64>}]} {
    %c0 = arith.constant 0 : index
    %c0_0 = arith.constant 0 : index
    %c0_1 = arith.constant 0 : index
    %0 = vector.load %arg3[%c0, %c0_0, %c0_1] : memref<1x8x160xf32, #tpu.memory_space<vmem>>, vector<1x8x160xf32>
    %1 = vector.shape_cast %0 : vector<1x8x160xf32> to vector<8x160xf32>
    %c0_2 = arith.constant 0 : index
    %c0_3 = arith.constant 0 : index
    %c0_4 = arith.constant 0 : index
    %c0_5 = arith.constant 0 : index
    %2 = vector.load %arg4[%c0_2, %c0_3, %c0_4, %c0_5] : memref<1x1x1x160xf32, #tpu.memory_space<vmem>>, vector<1x1x1x160xf32>
    %3 = vector.shape_cast %2 : vector<1x1x1x160xf32> to vector<1x160xf32>
    %4 = vector.extract_strided_slice %1 {offsets = [1, 0], sizes = [7, 160], strides = [1, 1]} : vector<8x160xf32> to vector<7x160xf32>
    %5 = tpu.concatenate %4, %3 in 0 : vector<7x160xf32>, vector<1x160xf32> -> vector<8x160xf32>
    %cst = arith.constant 0.000000e+00 : f32
    %6 = vector.broadcast %cst : f32 to vector<8x64xf32>
    %c0_6 = arith.constant 0 : index
    %c0_7 = arith.constant 0 : index
    %c0_8 = arith.constant 0 : index
    %7 = vector.load %arg2[%c0_6, %c0_7, %c0_8] : memref<3x15x64xf32, #tpu.memory_space<vmem>>, vector<1x1x64xf32>
    %8 = vector.shape_cast %7 : vector<1x1x64xf32> to vector<1x64xf32>
    %c1 = arith.constant 1 : index
    %c0_9 = arith.constant 0 : index
    %c0_10 = arith.constant 0 : index
    %9 = vector.load %arg2[%c1, %c0_9, %c0_10] : memref<3x15x64xf32, #tpu.memory_space<vmem>>, vector<1x1x64xf32>
    %10 = vector.shape_cast %9 : vector<1x1x64xf32> to vector<1x64xf32>
    %c2 = arith.constant 2 : index
    %c0_11 = arith.constant 0 : index
    %c0_12 = arith.constant 0 : index
    %11 = vector.load %arg2[%c2, %c0_11, %c0_12] : memref<3x15x64xf32, #tpu.memory_space<vmem>>, vector<1x1x64xf32>
    %12 = vector.shape_cast %11 : vector<1x1x64xf32> to vector<1x64xf32>
    %13 = vector.extract_strided_slice %1 {offsets = [0, 1], sizes = [8, 64], strides = [1, 1]} : vector<8x160xf32> to vector<8x64xf32>
    %14 = vector.broadcast %8 : vector<1x64xf32> to vector<8x64xf32>
    %15 = arith.mulf %13, %14 : vector<8x64xf32>
    %16 = arith.addf %6, %15 : vector<8x64xf32>
    %17 = vector.extract_strided_slice %1 {offsets = [0, 81], sizes = [8, 64], strides = [1, 1]} : vector<8x160xf32> to vector<8x64xf32>
    %18 = vector.broadcast %10 : vector<1x64xf32> to vector<8x64xf32>
    %19 = arith.mulf %17, %18 : vector<8x64xf32>
    %20 = arith.addf %16, %19 : vector<8x64xf32>
    %21 = vector.extract_strided_slice %5 {offsets = [0, 1], sizes = [8, 64], strides = [1, 1]} : vector<8x160xf32> to vector<8x64xf32>
    %22 = vector.broadcast %12 : vector<1x64xf32> to vector<8x64xf32>
    %23 = arith.mulf %21, %22 : vector<8x64xf32>
    %24 = arith.addf %20, %23 : vector<8x64xf32>
    %c0_13 = arith.constant 0 : index
    %c1_14 = arith.constant 1 : index
    %c0_15 = arith.constant 0 : index
    %25 = vector.load %arg2[%c0_13, %c1_14, %c0_15] : memref<3x15x64xf32, #tpu.memory_space<vmem>>, vector<1x1x64xf32>
    %26 = vector.shape_cast %25 : vector<1x1x64xf32> to vector<1x64xf32>
    %c1_16 = arith.constant 1 : index
    %c1_17 = arith.constant 1 : index
    %c0_18 = arith.constant 0 : index
    %27 = vector.load %arg2[%c1_16, %c1_17, %c0_18] : memref<3x15x64xf32, #tpu.memory_space<vmem>>, vector<1x1x64xf32>
    %28 = vector.shape_cast %27 : vector<1x1x64xf32> to vector<1x64xf32>
    %c2_19 = arith.constant 2 : index
    %c1_20 = arith.constant 1 : index
    %c0_21 = arith.constant 0 : index
    %29 = vector.load %arg2[%c2_19, %c1_20, %c0_21] : memref<3x15x64xf32, #tpu.memory_space<vmem>>, vector<1x1x64xf32>
    %30 = vector.shape_cast %29 : vector<1x1x64xf32> to vector<1x64xf32>
    %31 = vector.extract_strided_slice %1 {offsets = [0, 2], sizes = [8, 64], strides = [1, 1]} : vector<8x160xf32> to vector<8x64xf32>
    %32 = vector.broadcast %26 : vector<1x64xf32> to vector<8x64xf32>
    %33 = arith.mulf %31, %32 : vector<8x64xf32>
    %34 = arith.addf %24, %33 : vector<8x64xf32>
    %35 = vector.extract_strided_slice %1 {offsets = [0, 82], sizes = [8, 64], strides = [1, 1]} : vector<8x160xf32> to vector<8x64xf32>
    %36 = vector.broadcast %28 : vector<1x64xf32> to vector<8x64xf32>
    %37 = arith.mulf %35, %36 : vector<8x64xf32>
    %38 = arith.addf %34, %37 : vector<8x64xf32>
    %39 = vector.extract_strided_slice %5 {offsets = [0, 2], sizes = [8, 64], strides = [1, 1]} : vector<8x160xf32> to vector<8x64xf32>
    %40 = vector.broadcast %30 : vector<1x64xf32> to vector<8x64xf32>
    %41 = arith.mulf %39, %40 : vector<8x64xf32>
    %42 = arith.addf %38, %41 : vector<8x64xf32>
    %c0_22 = arith.constant 0 : index
    %c2_23 = arith.constant 2 : index
    %c0_24 = arith.constant 0 : index
    %43 = vector.load %arg2[%c0_22, %c2_23, %c0_24] : memref<3x15x64xf32, #tpu.memory_space<vmem>>, vector<1x1x64xf32>
    %44 = vector.shape_cast %43 : vector<1x1x64xf32> to vector<1x64xf32>
    %c1_25 = arith.constant 1 : index
    %c2_26 = arith.constant 2 : index
    %c0_27 = arith.constant 0 : index
    %45 = vector.load %arg2[%c1_25, %c2_26, %c0_27] : memref<3x15x64xf32, #tpu.memory_space<vmem>>, vector<1x1x64xf32>
    %46 = vector.shape_cast %45 : vector<1x1x64xf32> to vector<1x64xf32>
    %c2_28 = arith.constant 2 : index
    %c2_29 = arith.constant 2 : index
    %c0_30 = arith.constant 0 : index
    %47 = vector.load %arg2[%c2_28, %c2_29, %c0_30] : memref<3x15x64xf32, #tpu.memory_space<vmem>>, vector<1x1x64xf32>
    %48 = vector.shape_cast %47 : vector<1x1x64xf32> to vector<1x64xf32>
    %49 = vector.extract_strided_slice %1 {offsets = [0, 3], sizes = [8, 64], strides = [1, 1]} : vector<8x160xf32> to vector<8x64xf32>
    %50 = vector.broadcast %44 : vector<1x64xf32> to vector<8x64xf32>
    %51 = arith.mulf %49, %50 : vector<8x64xf32>
    %52 = arith.addf %42, %51 : vector<8x64xf32>
    %53 = vector.extract_strided_slice %1 {offsets = [0, 83], sizes = [8, 64], strides = [1, 1]} : vector<8x160xf32> to vector<8x64xf32>
    %54 = vector.broadcast %46 : vector<1x64xf32> to vector<8x64xf32>
    %55 = arith.mulf %53, %54 : vector<8x64xf32>
    %56 = arith.addf %52, %55 : vector<8x64xf32>
    %57 = vector.extract_strided_slice %5 {offsets = [0, 3], sizes = [8, 64], strides = [1, 1]} : vector<8x160xf32> to vector<8x64xf32>
    %58 = vector.broadcast %48 : vector<1x64xf32> to vector<8x64xf32>
    %59 = arith.mulf %57, %58 : vector<8x64xf32>
    %60 = arith.addf %56, %59 : vector<8x64xf32>
    %c0_31 = arith.constant 0 : index
    %c3 = arith.constant 3 : index
    %c0_32 = arith.constant 0 : index
    %61 = vector.load %arg2[%c0_31, %c3, %c0_32] : memref<3x15x64xf32, #tpu.memory_space<vmem>>, vector<1x1x64xf32>
    %62 = vector.shape_cast %61 : vector<1x1x64xf32> to vector<1x64xf32>
    %c1_33 = arith.constant 1 : index
    %c3_34 = arith.constant 3 : index
    %c0_35 = arith.constant 0 : index
    %63 = vector.load %arg2[%c1_33, %c3_34, %c0_35] : memref<3x15x64xf32, #tpu.memory_space<vmem>>, vector<1x1x64xf32>
    %64 = vector.shape_cast %63 : vector<1x1x64xf32> to vector<1x64xf32>
    %c2_36 = arith.constant 2 : index
    %c3_37 = arith.constant 3 : index
    %c0_38 = arith.constant 0 : index
    %65 = vector.load %arg2[%c2_36, %c3_37, %c0_38] : memref<3x15x64xf32, #tpu.memory_space<vmem>>, vector<1x1x64xf32>
    %66 = vector.shape_cast %65 : vector<1x1x64xf32> to vector<1x64xf32>
    %67 = vector.extract_strided_slice %1 {offsets = [0, 4], sizes = [8, 64], strides = [1, 1]} : vector<8x160xf32> to vector<8x64xf32>
    %68 = vector.broadcast %62 : vector<1x64xf32> to vector<8x64xf32>
    %69 = arith.mulf %67, %68 : vector<8x64xf32>
    %70 = arith.addf %60, %69 : vector<8x64xf32>
    %71 = vector.extract_strided_slice %1 {offsets = [0, 84], sizes = [8, 64], strides = [1, 1]} : vector<8x160xf32> to vector<8x64xf32>
    %72 = vector.broadcast %64 : vector<1x64xf32> to vector<8x64xf32>
    %73 = arith.mulf %71, %72 : vector<8x64xf32>
    %74 = arith.addf %70, %73 : vector<8x64xf32>
    %75 = vector.extract_strided_slice %5 {offsets = [0, 4], sizes = [8, 64], strides = [1, 1]} : vector<8x160xf32> to vector<8x64xf32>
    %76 = vector.broadcast %66 : vector<1x64xf32> to vector<8x64xf32>
    %77 = arith.mulf %75, %76 : vector<8x64xf32>
    %78 = arith.addf %74, %77 : vector<8x64xf32>
    %c0_39 = arith.constant 0 : index
    %c4 = arith.constant 4 : index
    %c0_40 = arith.constant 0 : index
    %79 = vector.load %arg2[%c0_39, %c4, %c0_40] : memref<3x15x64xf32, #tpu.memory_space<vmem>>, vector<1x1x64xf32>
    %80 = vector.shape_cast %79 : vector<1x1x64xf32> to vector<1x64xf32>
    %c1_41 = arith.constant 1 : index
    %c4_42 = arith.constant 4 : index
    %c0_43 = arith.constant 0 : index
    %81 = vector.load %arg2[%c1_41, %c4_42, %c0_43] : memref<3x15x64xf32, #tpu.memory_space<vmem>>, vector<1x1x64xf32>
    %82 = vector.shape_cast %81 : vector<1x1x64xf32> to vector<1x64xf32>
    %c2_44 = arith.constant 2 : index
    %c4_45 = arith.constant 4 : index
    %c0_46 = arith.constant 0 : index
    %83 = vector.load %arg2[%c2_44, %c4_45, %c0_46] : memref<3x15x64xf32, #tpu.memory_space<vmem>>, vector<1x1x64xf32>
    %84 = vector.shape_cast %83 : vector<1x1x64xf32> to vector<1x64xf32>
    %85 = vector.extract_strided_slice %1 {offsets = [0, 5], sizes = [8, 64], strides = [1, 1]} : vector<8x160xf32> to vector<8x64xf32>
    %86 = vector.broadcast %80 : vector<1x64xf32> to vector<8x64xf32>
    %87 = arith.mulf %85, %86 : vector<8x64xf32>
    %88 = arith.addf %78, %87 : vector<8x64xf32>
    %89 = vector.extract_strided_slice %1 {offsets = [0, 85], sizes = [8, 64], strides = [1, 1]} : vector<8x160xf32> to vector<8x64xf32>
    %90 = vector.broadcast %82 : vector<1x64xf32> to vector<8x64xf32>
    %91 = arith.mulf %89, %90 : vector<8x64xf32>
    %92 = arith.addf %88, %91 : vector<8x64xf32>
    %93 = vector.extract_strided_slice %5 {offsets = [0, 5], sizes = [8, 64], strides = [1, 1]} : vector<8x160xf32> to vector<8x64xf32>
    %94 = vector.broadcast %84 : vector<1x64xf32> to vector<8x64xf32>
    %95 = arith.mulf %93, %94 : vector<8x64xf32>
    %96 = arith.addf %92, %95 : vector<8x64xf32>
    %c0_47 = arith.constant 0 : index
    %c5 = arith.constant 5 : index
    %c0_48 = arith.constant 0 : index
    %97 = vector.load %arg2[%c0_47, %c5, %c0_48] : memref<3x15x64xf32, #tpu.memory_space<vmem>>, vector<1x1x64xf32>
    %98 = vector.shape_cast %97 : vector<1x1x64xf32> to vector<1x64xf32>
    %c1_49 = arith.constant 1 : index
    %c5_50 = arith.constant 5 : index
    %c0_51 = arith.constant 0 : index
    %99 = vector.load %arg2[%c1_49, %c5_50, %c0_51] : memref<3x15x64xf32, #tpu.memory_space<vmem>>, vector<1x1x64xf32>
    %100 = vector.shape_cast %99 : vector<1x1x64xf32> to vector<1x64xf32>
    %c2_52 = arith.constant 2 : index
    %c5_53 = arith.constant 5 : index
    %c0_54 = arith.constant 0 : index
    %101 = vector.load %arg2[%c2_52, %c5_53, %c0_54] : memref<3x15x64xf32, #tpu.memory_space<vmem>>, vector<1x1x64xf32>
    %102 = vector.shape_cast %101 : vector<1x1x64xf32> to vector<1x64xf32>
    %103 = vector.extract_strided_slice %1 {offsets = [0, 6], sizes = [8, 64], strides = [1, 1]} : vector<8x160xf32> to vector<8x64xf32>
    %104 = vector.broadcast %98 : vector<1x64xf32> to vector<8x64xf32>
    %105 = arith.mulf %103, %104 : vector<8x64xf32>
    %106 = arith.addf %96, %105 : vector<8x64xf32>
    %107 = vector.extract_strided_slice %1 {offsets = [0, 86], sizes = [8, 64], strides = [1, 1]} : vector<8x160xf32> to vector<8x64xf32>
    %108 = vector.broadcast %100 : vector<1x64xf32> to vector<8x64xf32>
    %109 = arith.mulf %107, %108 : vector<8x64xf32>
    %110 = arith.addf %106, %109 : vector<8x64xf32>
    %111 = vector.extract_strided_slice %5 {offsets = [0, 6], sizes = [8, 64], strides = [1, 1]} : vector<8x160xf32> to vector<8x64xf32>
    %112 = vector.broadcast %102 : vector<1x64xf32> to vector<8x64xf32>
    %113 = arith.mulf %111, %112 : vector<8x64xf32>
    %114 = arith.addf %110, %113 : vector<8x64xf32>
    %c0_55 = arith.constant 0 : index
    %c6 = arith.constant 6 : index
    %c0_56 = arith.constant 0 : index
    %115 = vector.load %arg2[%c0_55, %c6, %c0_56] : memref<3x15x64xf32, #tpu.memory_space<vmem>>, vector<1x1x64xf32>
    %116 = vector.shape_cast %115 : vector<1x1x64xf32> to vector<1x64xf32>
    %c1_57 = arith.constant 1 : index
    %c6_58 = arith.constant 6 : index
    %c0_59 = arith.constant 0 : index
    %117 = vector.load %arg2[%c1_57, %c6_58, %c0_59] : memref<3x15x64xf32, #tpu.memory_space<vmem>>, vector<1x1x64xf32>
    %118 = vector.shape_cast %117 : vector<1x1x64xf32> to vector<1x64xf32>
    %c2_60 = arith.constant 2 : index
    %c6_61 = arith.constant 6 : index
    %c0_62 = arith.constant 0 : index
    %119 = vector.load %arg2[%c2_60, %c6_61, %c0_62] : memref<3x15x64xf32, #tpu.memory_space<vmem>>, vector<1x1x64xf32>
    %120 = vector.shape_cast %119 : vector<1x1x64xf32> to vector<1x64xf32>
    %121 = vector.extract_strided_slice %1 {offsets = [0, 7], sizes = [8, 64], strides = [1, 1]} : vector<8x160xf32> to vector<8x64xf32>
    %122 = vector.broadcast %116 : vector<1x64xf32> to vector<8x64xf32>
    %123 = arith.mulf %121, %122 : vector<8x64xf32>
    %124 = arith.addf %114, %123 : vector<8x64xf32>
    %125 = vector.extract_strided_slice %1 {offsets = [0, 87], sizes = [8, 64], strides = [1, 1]} : vector<8x160xf32> to vector<8x64xf32>
    %126 = vector.broadcast %118 : vector<1x64xf32> to vector<8x64xf32>
    %127 = arith.mulf %125, %126 : vector<8x64xf32>
    %128 = arith.addf %124, %127 : vector<8x64xf32>
    %129 = vector.extract_strided_slice %5 {offsets = [0, 7], sizes = [8, 64], strides = [1, 1]} : vector<8x160xf32> to vector<8x64xf32>
    %130 = vector.broadcast %120 : vector<1x64xf32> to vector<8x64xf32>
    %131 = arith.mulf %129, %130 : vector<8x64xf32>
    %132 = arith.addf %128, %131 : vector<8x64xf32>
    %c0_63 = arith.constant 0 : index
    %c7 = arith.constant 7 : index
    %c0_64 = arith.constant 0 : index
    %133 = vector.load %arg2[%c0_63, %c7, %c0_64] : memref<3x15x64xf32, #tpu.memory_space<vmem>>, vector<1x1x64xf32>
    %134 = vector.shape_cast %133 : vector<1x1x64xf32> to vector<1x64xf32>
    %c1_65 = arith.constant 1 : index
    %c7_66 = arith.constant 7 : index
    %c0_67 = arith.constant 0 : index
    %135 = vector.load %arg2[%c1_65, %c7_66, %c0_67] : memref<3x15x64xf32, #tpu.memory_space<vmem>>, vector<1x1x64xf32>
    %136 = vector.shape_cast %135 : vector<1x1x64xf32> to vector<1x64xf32>
    %c2_68 = arith.constant 2 : index
    %c7_69 = arith.constant 7 : index
    %c0_70 = arith.constant 0 : index
    %137 = vector.load %arg2[%c2_68, %c7_69, %c0_70] : memref<3x15x64xf32, #tpu.memory_space<vmem>>, vector<1x1x64xf32>
    %138 = vector.shape_cast %137 : vector<1x1x64xf32> to vector<1x64xf32>
    %139 = vector.extract_strided_slice %1 {offsets = [0, 8], sizes = [8, 64], strides = [1, 1]} : vector<8x160xf32> to vector<8x64xf32>
    %140 = vector.broadcast %134 : vector<1x64xf32> to vector<8x64xf32>
    %141 = arith.mulf %139, %140 : vector<8x64xf32>
    %142 = arith.addf %132, %141 : vector<8x64xf32>
    %143 = vector.extract_strided_slice %1 {offsets = [0, 88], sizes = [8, 64], strides = [1, 1]} : vector<8x160xf32> to vector<8x64xf32>
    %144 = vector.broadcast %136 : vector<1x64xf32> to vector<8x64xf32>
    %145 = arith.mulf %143, %144 : vector<8x64xf32>
    %146 = arith.addf %142, %145 : vector<8x64xf32>
    %147 = vector.extract_strided_slice %5 {offsets = [0, 8], sizes = [8, 64], strides = [1, 1]} : vector<8x160xf32> to vector<8x64xf32>
    %148 = vector.broadcast %138 : vector<1x64xf32> to vector<8x64xf32>
    %149 = arith.mulf %147, %148 : vector<8x64xf32>
    %150 = arith.addf %146, %149 : vector<8x64xf32>
    %c0_71 = arith.constant 0 : index
    %c8 = arith.constant 8 : index
    %c0_72 = arith.constant 0 : index
    %151 = vector.load %arg2[%c0_71, %c8, %c0_72] : memref<3x15x64xf32, #tpu.memory_space<vmem>>, vector<1x1x64xf32>
    %152 = vector.shape_cast %151 : vector<1x1x64xf32> to vector<1x64xf32>
    %c1_73 = arith.constant 1 : index
    %c8_74 = arith.constant 8 : index
    %c0_75 = arith.constant 0 : index
    %153 = vector.load %arg2[%c1_73, %c8_74, %c0_75] : memref<3x15x64xf32, #tpu.memory_space<vmem>>, vector<1x1x64xf32>
    %154 = vector.shape_cast %153 : vector<1x1x64xf32> to vector<1x64xf32>
    %c2_76 = arith.constant 2 : index
    %c8_77 = arith.constant 8 : index
    %c0_78 = arith.constant 0 : index
    %155 = vector.load %arg2[%c2_76, %c8_77, %c0_78] : memref<3x15x64xf32, #tpu.memory_space<vmem>>, vector<1x1x64xf32>
    %156 = vector.shape_cast %155 : vector<1x1x64xf32> to vector<1x64xf32>
    %157 = vector.extract_strided_slice %1 {offsets = [0, 9], sizes = [8, 64], strides = [1, 1]} : vector<8x160xf32> to vector<8x64xf32>
    %158 = vector.broadcast %152 : vector<1x64xf32> to vector<8x64xf32>
    %159 = arith.mulf %157, %158 : vector<8x64xf32>
    %160 = arith.addf %150, %159 : vector<8x64xf32>
    %161 = vector.extract_strided_slice %1 {offsets = [0, 89], sizes = [8, 64], strides = [1, 1]} : vector<8x160xf32> to vector<8x64xf32>
    %162 = vector.broadcast %154 : vector<1x64xf32> to vector<8x64xf32>
    %163 = arith.mulf %161, %162 : vector<8x64xf32>
    %164 = arith.addf %160, %163 : vector<8x64xf32>
    %165 = vector.extract_strided_slice %5 {offsets = [0, 9], sizes = [8, 64], strides = [1, 1]} : vector<8x160xf32> to vector<8x64xf32>
    %166 = vector.broadcast %156 : vector<1x64xf32> to vector<8x64xf32>
    %167 = arith.mulf %165, %166 : vector<8x64xf32>
    %168 = arith.addf %164, %167 : vector<8x64xf32>
    %c0_79 = arith.constant 0 : index
    %c9 = arith.constant 9 : index
    %c0_80 = arith.constant 0 : index
    %169 = vector.load %arg2[%c0_79, %c9, %c0_80] : memref<3x15x64xf32, #tpu.memory_space<vmem>>, vector<1x1x64xf32>
    %170 = vector.shape_cast %169 : vector<1x1x64xf32> to vector<1x64xf32>
    %c1_81 = arith.constant 1 : index
    %c9_82 = arith.constant 9 : index
    %c0_83 = arith.constant 0 : index
    %171 = vector.load %arg2[%c1_81, %c9_82, %c0_83] : memref<3x15x64xf32, #tpu.memory_space<vmem>>, vector<1x1x64xf32>
    %172 = vector.shape_cast %171 : vector<1x1x64xf32> to vector<1x64xf32>
    %c2_84 = arith.constant 2 : index
    %c9_85 = arith.constant 9 : index
    %c0_86 = arith.constant 0 : index
    %173 = vector.load %arg2[%c2_84, %c9_85, %c0_86] : memref<3x15x64xf32, #tpu.memory_space<vmem>>, vector<1x1x64xf32>
    %174 = vector.shape_cast %173 : vector<1x1x64xf32> to vector<1x64xf32>
    %175 = vector.extract_strided_slice %1 {offsets = [0, 10], sizes = [8, 64], strides = [1, 1]} : vector<8x160xf32> to vector<8x64xf32>
    %176 = vector.broadcast %170 : vector<1x64xf32> to vector<8x64xf32>
    %177 = arith.mulf %175, %176 : vector<8x64xf32>
    %178 = arith.addf %168, %177 : vector<8x64xf32>
    %179 = vector.extract_strided_slice %1 {offsets = [0, 90], sizes = [8, 64], strides = [1, 1]} : vector<8x160xf32> to vector<8x64xf32>
    %180 = vector.broadcast %172 : vector<1x64xf32> to vector<8x64xf32>
    %181 = arith.mulf %179, %180 : vector<8x64xf32>
    %182 = arith.addf %178, %181 : vector<8x64xf32>
    %183 = vector.extract_strided_slice %5 {offsets = [0, 10], sizes = [8, 64], strides = [1, 1]} : vector<8x160xf32> to vector<8x64xf32>
    %184 = vector.broadcast %174 : vector<1x64xf32> to vector<8x64xf32>
    %185 = arith.mulf %183, %184 : vector<8x64xf32>
    %186 = arith.addf %182, %185 : vector<8x64xf32>
    %c0_87 = arith.constant 0 : index
    %c10 = arith.constant 10 : index
    %c0_88 = arith.constant 0 : index
    %187 = vector.load %arg2[%c0_87, %c10, %c0_88] : memref<3x15x64xf32, #tpu.memory_space<vmem>>, vector<1x1x64xf32>
    %188 = vector.shape_cast %187 : vector<1x1x64xf32> to vector<1x64xf32>
    %c1_89 = arith.constant 1 : index
    %c10_90 = arith.constant 10 : index
    %c0_91 = arith.constant 0 : index
    %189 = vector.load %arg2[%c1_89, %c10_90, %c0_91] : memref<3x15x64xf32, #tpu.memory_space<vmem>>, vector<1x1x64xf32>
    %190 = vector.shape_cast %189 : vector<1x1x64xf32> to vector<1x64xf32>
    %c2_92 = arith.constant 2 : index
    %c10_93 = arith.constant 10 : index
    %c0_94 = arith.constant 0 : index
    %191 = vector.load %arg2[%c2_92, %c10_93, %c0_94] : memref<3x15x64xf32, #tpu.memory_space<vmem>>, vector<1x1x64xf32>
    %192 = vector.shape_cast %191 : vector<1x1x64xf32> to vector<1x64xf32>
    %193 = vector.extract_strided_slice %1 {offsets = [0, 11], sizes = [8, 64], strides = [1, 1]} : vector<8x160xf32> to vector<8x64xf32>
    %194 = vector.broadcast %188 : vector<1x64xf32> to vector<8x64xf32>
    %195 = arith.mulf %193, %194 : vector<8x64xf32>
    %196 = arith.addf %186, %195 : vector<8x64xf32>
    %197 = vector.extract_strided_slice %1 {offsets = [0, 91], sizes = [8, 64], strides = [1, 1]} : vector<8x160xf32> to vector<8x64xf32>
    %198 = vector.broadcast %190 : vector<1x64xf32> to vector<8x64xf32>
    %199 = arith.mulf %197, %198 : vector<8x64xf32>
    %200 = arith.addf %196, %199 : vector<8x64xf32>
    %201 = vector.extract_strided_slice %5 {offsets = [0, 11], sizes = [8, 64], strides = [1, 1]} : vector<8x160xf32> to vector<8x64xf32>
    %202 = vector.broadcast %192 : vector<1x64xf32> to vector<8x64xf32>
    %203 = arith.mulf %201, %202 : vector<8x64xf32>
    %204 = arith.addf %200, %203 : vector<8x64xf32>
    %c0_95 = arith.constant 0 : index
    %c11 = arith.constant 11 : index
    %c0_96 = arith.constant 0 : index
    %205 = vector.load %arg2[%c0_95, %c11, %c0_96] : memref<3x15x64xf32, #tpu.memory_space<vmem>>, vector<1x1x64xf32>
    %206 = vector.shape_cast %205 : vector<1x1x64xf32> to vector<1x64xf32>
    %c1_97 = arith.constant 1 : index
    %c11_98 = arith.constant 11 : index
    %c0_99 = arith.constant 0 : index
    %207 = vector.load %arg2[%c1_97, %c11_98, %c0_99] : memref<3x15x64xf32, #tpu.memory_space<vmem>>, vector<1x1x64xf32>
    %208 = vector.shape_cast %207 : vector<1x1x64xf32> to vector<1x64xf32>
    %c2_100 = arith.constant 2 : index
    %c11_101 = arith.constant 11 : index
    %c0_102 = arith.constant 0 : index
    %209 = vector.load %arg2[%c2_100, %c11_101, %c0_102] : memref<3x15x64xf32, #tpu.memory_space<vmem>>, vector<1x1x64xf32>
    %210 = vector.shape_cast %209 : vector<1x1x64xf32> to vector<1x64xf32>
    %211 = vector.extract_strided_slice %1 {offsets = [0, 12], sizes = [8, 64], strides = [1, 1]} : vector<8x160xf32> to vector<8x64xf32>
    %212 = vector.broadcast %206 : vector<1x64xf32> to vector<8x64xf32>
    %213 = arith.mulf %211, %212 : vector<8x64xf32>
    %214 = arith.addf %204, %213 : vector<8x64xf32>
    %215 = vector.extract_strided_slice %1 {offsets = [0, 92], sizes = [8, 64], strides = [1, 1]} : vector<8x160xf32> to vector<8x64xf32>
    %216 = vector.broadcast %208 : vector<1x64xf32> to vector<8x64xf32>
    %217 = arith.mulf %215, %216 : vector<8x64xf32>
    %218 = arith.addf %214, %217 : vector<8x64xf32>
    %219 = vector.extract_strided_slice %5 {offsets = [0, 12], sizes = [8, 64], strides = [1, 1]} : vector<8x160xf32> to vector<8x64xf32>
    %220 = vector.broadcast %210 : vector<1x64xf32> to vector<8x64xf32>
    %221 = arith.mulf %219, %220 : vector<8x64xf32>
    %222 = arith.addf %218, %221 : vector<8x64xf32>
    %c0_103 = arith.constant 0 : index
    %c12 = arith.constant 12 : index
    %c0_104 = arith.constant 0 : index
    %223 = vector.load %arg2[%c0_103, %c12, %c0_104] : memref<3x15x64xf32, #tpu.memory_space<vmem>>, vector<1x1x64xf32>
    %224 = vector.shape_cast %223 : vector<1x1x64xf32> to vector<1x64xf32>
    %c1_105 = arith.constant 1 : index
    %c12_106 = arith.constant 12 : index
    %c0_107 = arith.constant 0 : index
    %225 = vector.load %arg2[%c1_105, %c12_106, %c0_107] : memref<3x15x64xf32, #tpu.memory_space<vmem>>, vector<1x1x64xf32>
    %226 = vector.shape_cast %225 : vector<1x1x64xf32> to vector<1x64xf32>
    %c2_108 = arith.constant 2 : index
    %c12_109 = arith.constant 12 : index
    %c0_110 = arith.constant 0 : index
    %227 = vector.load %arg2[%c2_108, %c12_109, %c0_110] : memref<3x15x64xf32, #tpu.memory_space<vmem>>, vector<1x1x64xf32>
    %228 = vector.shape_cast %227 : vector<1x1x64xf32> to vector<1x64xf32>
    %229 = vector.extract_strided_slice %1 {offsets = [0, 13], sizes = [8, 64], strides = [1, 1]} : vector<8x160xf32> to vector<8x64xf32>
    %230 = vector.broadcast %224 : vector<1x64xf32> to vector<8x64xf32>
    %231 = arith.mulf %229, %230 : vector<8x64xf32>
    %232 = arith.addf %222, %231 : vector<8x64xf32>
    %233 = vector.extract_strided_slice %1 {offsets = [0, 93], sizes = [8, 64], strides = [1, 1]} : vector<8x160xf32> to vector<8x64xf32>
    %234 = vector.broadcast %226 : vector<1x64xf32> to vector<8x64xf32>
    %235 = arith.mulf %233, %234 : vector<8x64xf32>
    %236 = arith.addf %232, %235 : vector<8x64xf32>
    %237 = vector.extract_strided_slice %5 {offsets = [0, 13], sizes = [8, 64], strides = [1, 1]} : vector<8x160xf32> to vector<8x64xf32>
    %238 = vector.broadcast %228 : vector<1x64xf32> to vector<8x64xf32>
    %239 = arith.mulf %237, %238 : vector<8x64xf32>
    %240 = arith.addf %236, %239 : vector<8x64xf32>
    %c0_111 = arith.constant 0 : index
    %c13 = arith.constant 13 : index
    %c0_112 = arith.constant 0 : index
    %241 = vector.load %arg2[%c0_111, %c13, %c0_112] : memref<3x15x64xf32, #tpu.memory_space<vmem>>, vector<1x1x64xf32>
    %242 = vector.shape_cast %241 : vector<1x1x64xf32> to vector<1x64xf32>
    %c1_113 = arith.constant 1 : index
    %c13_114 = arith.constant 13 : index
    %c0_115 = arith.constant 0 : index
    %243 = vector.load %arg2[%c1_113, %c13_114, %c0_115] : memref<3x15x64xf32, #tpu.memory_space<vmem>>, vector<1x1x64xf32>
    %244 = vector.shape_cast %243 : vector<1x1x64xf32> to vector<1x64xf32>
    %c2_116 = arith.constant 2 : index
    %c13_117 = arith.constant 13 : index
    %c0_118 = arith.constant 0 : index
    %245 = vector.load %arg2[%c2_116, %c13_117, %c0_118] : memref<3x15x64xf32, #tpu.memory_space<vmem>>, vector<1x1x64xf32>
    %246 = vector.shape_cast %245 : vector<1x1x64xf32> to vector<1x64xf32>
    %247 = vector.extract_strided_slice %1 {offsets = [0, 14], sizes = [8, 64], strides = [1, 1]} : vector<8x160xf32> to vector<8x64xf32>
    %248 = vector.broadcast %242 : vector<1x64xf32> to vector<8x64xf32>
    %249 = arith.mulf %247, %248 : vector<8x64xf32>
    %250 = arith.addf %240, %249 : vector<8x64xf32>
    %251 = vector.extract_strided_slice %1 {offsets = [0, 94], sizes = [8, 64], strides = [1, 1]} : vector<8x160xf32> to vector<8x64xf32>
    %252 = vector.broadcast %244 : vector<1x64xf32> to vector<8x64xf32>
    %253 = arith.mulf %251, %252 : vector<8x64xf32>
    %254 = arith.addf %250, %253 : vector<8x64xf32>
    %255 = vector.extract_strided_slice %5 {offsets = [0, 14], sizes = [8, 64], strides = [1, 1]} : vector<8x160xf32> to vector<8x64xf32>
    %256 = vector.broadcast %246 : vector<1x64xf32> to vector<8x64xf32>
    %257 = arith.mulf %255, %256 : vector<8x64xf32>
    %258 = arith.addf %254, %257 : vector<8x64xf32>
    %c0_119 = arith.constant 0 : index
    %c14 = arith.constant 14 : index
    %c0_120 = arith.constant 0 : index
    %259 = vector.load %arg2[%c0_119, %c14, %c0_120] : memref<3x15x64xf32, #tpu.memory_space<vmem>>, vector<1x1x64xf32>
    %260 = vector.shape_cast %259 : vector<1x1x64xf32> to vector<1x64xf32>
    %c1_121 = arith.constant 1 : index
    %c14_122 = arith.constant 14 : index
    %c0_123 = arith.constant 0 : index
    %261 = vector.load %arg2[%c1_121, %c14_122, %c0_123] : memref<3x15x64xf32, #tpu.memory_space<vmem>>, vector<1x1x64xf32>
    %262 = vector.shape_cast %261 : vector<1x1x64xf32> to vector<1x64xf32>
    %c2_124 = arith.constant 2 : index
    %c14_125 = arith.constant 14 : index
    %c0_126 = arith.constant 0 : index
    %263 = vector.load %arg2[%c2_124, %c14_125, %c0_126] : memref<3x15x64xf32, #tpu.memory_space<vmem>>, vector<1x1x64xf32>
    %264 = vector.shape_cast %263 : vector<1x1x64xf32> to vector<1x64xf32>
    %265 = vector.extract_strided_slice %1 {offsets = [0, 15], sizes = [8, 64], strides = [1, 1]} : vector<8x160xf32> to vector<8x64xf32>
    %266 = vector.broadcast %260 : vector<1x64xf32> to vector<8x64xf32>
    %267 = arith.mulf %265, %266 : vector<8x64xf32>
    %268 = arith.addf %258, %267 : vector<8x64xf32>
    %269 = vector.extract_strided_slice %1 {offsets = [0, 95], sizes = [8, 64], strides = [1, 1]} : vector<8x160xf32> to vector<8x64xf32>
    %270 = vector.broadcast %262 : vector<1x64xf32> to vector<8x64xf32>
    %271 = arith.mulf %269, %270 : vector<8x64xf32>
    %272 = arith.addf %268, %271 : vector<8x64xf32>
    %273 = vector.extract_strided_slice %5 {offsets = [0, 15], sizes = [8, 64], strides = [1, 1]} : vector<8x160xf32> to vector<8x64xf32>
    %274 = vector.broadcast %264 : vector<1x64xf32> to vector<8x64xf32>
    %275 = arith.mulf %273, %274 : vector<8x64xf32>
    %276 = arith.addf %272, %275 : vector<8x64xf32>
    %cst_127 = arith.constant 0.000000e+00 : f32
    %277 = vector.broadcast %cst_127 : f32 to vector<8x64xf32>
    %278 = arith.cmpf oge, %276, %277 : vector<8x64xf32>
    %cst_128 = arith.constant 0.00999999977 : f32
    %279 = vector.broadcast %cst_128 : f32 to vector<8x64xf32>
    %280 = arith.mulf %279, %276 : vector<8x64xf32>
    %281 = arith.select %278, %276, %280 : vector<8x64xi1>, vector<8x64xf32>
    %c0_129 = arith.constant 0 : index
    %c0_130 = arith.constant 0 : index
    %c0_131 = arith.constant 0 : index
    %282 = vector.load %arg5[%c0_129, %c0_130, %c0_131] : memref<1x8x64xf32, #tpu.memory_space<vmem>>, vector<1x8x64xf32>
    %283 = vector.shape_cast %282 : vector<1x8x64xf32> to vector<8x64xf32>
    %284 = vector.shape_cast %281 : vector<8x64xf32> to vector<1x8x64xf32>
    tpu.vector_store %arg5[%c0_129, %c0_130, %c0_131], %284 {strides = array<i32>} : memref<1x8x64xf32, #tpu.memory_space<vmem>>, vector<1x8x64xf32>,
    return
  }
  func.func @transform_0(%arg0: i32, %arg1: i32) -> (i32, i32, i32) {
    %c0_i32 = arith.constant 0 : i32
    %c0_i32_0 = arith.constant 0 : i32
    %c0_i32_1 = arith.constant 0 : i32
    %c0_i32_2 = arith.constant 0 : i32
    return %c0_i32, %c0_i32_0, %c0_i32_1 : i32, i32, i32
  }
  func.func @transform_1(%arg0: i32, %arg1: i32) -> (i32, i32, i32) {
    %c0_i32 = arith.constant 0 : i32
    %c0_i32_0 = arith.constant 0 : i32
    return %arg0, %arg1, %c0_i32 : i32, i32, i32
  }
  func.func @transform_2(%arg0: i32, %arg1: i32) -> (i32, i32, i32, i32) {
    %c0_i32 = arith.constant 0 : i32
    %c0_i32_0 = arith.constant 0 : i32
    %c0_i32_1 = arith.constant 0 : i32
    return %arg0, %arg1, %c0_i32, %c0_i32_0 : i32, i32, i32, i32
  }
  func.func @transform_3(%arg0: i32, %arg1: i32) -> (i32, i32, i32) {
    %c0_i32 = arith.constant 0 : i32
    %c0_i32_0 = arith.constant 0 : i32
    return %arg0, %arg1, %c0_i32 : i32, i32, i32
  }
}

</mosaic_0001>

<llo_original>
// kernel: down_sample_nchw.1
$region0: #{down_sample_nchw.1}
  #allocation0 [shape = 'u32[]', space=smem, size = 0x4, offset = 0x4, fixed_abs, tag = 'smem constant byte address 0x4 - core index']
  #allocation1 [shape = 'u32[72,128]{1,0:T(1,128)}', space=vmem, size = 0x9000, scoped, tag = 'internal scratch']
  %s0 = inlined_call_operand.vmem [shape: f32[3,15,64], index: 0, kind: input, shape index: {}]
  %s1 = inlined_call_operand.vmem [shape: f32[2,9,160], index: 1, kind: input, shape index: {}]
  %s2 = inlined_call_operand.vmem [shape: f32[2,1,1,160], index: 2, kind: input, shape index: {}]
  %s3 = inlined_call_operand.vmem [shape: f32[2,8,64], index: 3, kind: output, shape index: {}]
  %s4 = sld [smem:[#allocation0]]
  $region45: #{down_sample_nchw.1} parent=0
    _
  %s6 = ssub.s32 1, %s4
  %s7 = scalar_select 0, %s6, %s4
  loop: start=0, step=1, limit=4
  $region2: #{down_sample_nchw.1} parent=0 // loop_pre_header
    _
  $region3: #{down_sample_nchw.1} parent=0 // loop_header
    %s9 = sphi 0, %s13
    %p10 = scmp.ge.s32.totalorder %s9, 4
    %s16 = sphi 0, %s28
    %s17 = sphi 0, %s24
    %s18 = sphi 0, %s16
    %s19 = sphi 0, %s17
    %s20 = sphi 0, %s18
    %s21 = sphi 0, %s19
    %s29 = sphi 0, %s29
    %s31 = sphi 0, %s29
    %s32 = sphi 0, %s31
    %s46 = sphi 0, %s32
    %s54 = sphi 0, %s56
    %s57 = sphi 0, %s54
    %s58 = sphi 0, %s57
    %s74 = sphi 0, %s58
    %s82 = sphi 0, %s84
    %s85 = sphi 0, %s82
    %s86 = sphi 0, %s85
    %s102 = sphi 0, %s86
    %s110 = sphi 0, %s112
    %s113 = sphi 0, %s110
    %s114 = sphi 0, %s113
    %s130 = sphi 0, %s114
  $region4: #{down_sample_nchw.1} parent=0 // loop_header_branch
    %12 = sbr.rel (%p10) target = $region8
  $region5: #{down_sample_nchw.1} parent=0 // loop_body
    %s14 = ssub.s32 %s9, 1
    %s15 = ssub.s32 %s9, 2
    %s22 = sadd.s32 1, %s17
    %p23 = scmp.ge.s32.totalorder %s22, 1
    %s24 = scalar_select %p23, 0, %s22
    %s25 = sadd.s32 1, %s16
    %s26 = scalar_select %p23, %s25, %s16
    %p27 = scmp.ge.s32.totalorder %s26, 2
    %s28 = scalar_select %p27, 0, %s26
    %s30 = sadd.s32 %s29, 1
    %p33 = scmp.eq.s32.totalorder %s9, 1
    %p34 = scmp.ne.s32.totalorder %s29, %s31
    %p35 = scmp.eq.s32.totalorder %s9, 0
    %p36 = por %p34, %p35
    %p37 = scmp.ne.s32.totalorder %s29, %s31
    %p38 = scmp.eq.s32.totalorder %s14, 1
    %p39 = por %p37, %p38
    %p40 = scmp.ne.s32.totalorder %s31, %s32
    %p41 = scmp.eq.s32.totalorder %s14, 0
    %p42 = por %p40, %p41
    %p43 = scmp.ne.s32.totalorder %s31, %s32
    %p44 = scmp.eq.s32.totalorder %s15, 1
    %p45 = por %p43, %p44
    %p47 = scmp.ne.s32.totalorder %s32, %s46
    %p48 = scmp.eq.s32.totalorder %s15, 0
    %p49 = por %p47, %p48
    %s50 = ssub.s32 %s16, %s28
    %s51 = ssub.s32 %s17, %s24
    %s52 = sor.u32 %s50, %s51
    %p53 = scmp.eq.s32.totalorder %s52, 0
    %s55 = sadd.s32 %s54, 1
    %s56 = scalar_select %p53, %s54, %s55
    %p59 = pneg %p53
    %p60 = scmp.eq.s32.totalorder %s9, 1
    %p61 = por %p59, %p60
    %p62 = scmp.ne.s32.totalorder %s54, %s57
    %p63 = scmp.eq.s32.totalorder %s9, 0
    %p64 = por %p62, %p63
    %p65 = scmp.ne.s32.totalorder %s54, %s57
    %p66 = scmp.eq.s32.totalorder %s14, 1
    %p67 = por %p65, %p66
    %p68 = scmp.ne.s32.totalorder %s57, %s58
    %p69 = scmp.eq.s32.totalorder %s14, 0
    %p70 = por %p68, %p69
    %p71 = scmp.ne.s32.totalorder %s57, %s58
    %p72 = scmp.eq.s32.totalorder %s15, 1
    %p73 = por %p71, %p72
    %p75 = scmp.ne.s32.totalorder %s58, %s74
    %p76 = scmp.eq.s32.totalorder %s15, 0
    %p77 = por %p75, %p76
    %s78 = ssub.s32 %s16, %s28
    %s79 = ssub.s32 %s17, %s24
    %s80 = sor.u32 %s78, %s79
    %p81 = scmp.eq.s32.totalorder %s80, 0
    %s83 = sadd.s32 %s82, 1
    %s84 = scalar_select %p81, %s82, %s83
    %p87 = pneg %p81
    %p88 = scmp.eq.s32.totalorder %s9, 1
    %p89 = por %p87, %p88
    %p90 = scmp.ne.s32.totalorder %s82, %s85
    %p91 = scmp.eq.s32.totalorder %s9, 0
    %p92 = por %p90, %p91
    %p93 = scmp.ne.s32.totalorder %s82, %s85
    %p94 = scmp.eq.s32.totalorder %s14, 1
    %p95 = por %p93, %p94
    %p96 = scmp.ne.s32.totalorder %s85, %s86
    %p97 = scmp.eq.s32.totalorder %s14, 0
    %p98 = por %p96, %p97
    %p99 = scmp.ne.s32.totalorder %s85, %s86
    %p100 = scmp.eq.s32.totalorder %s15, 1
    %p101 = por %p99, %p100
    %p103 = scmp.ne.s32.totalorder %s86, %s102
    %p104 = scmp.eq.s32.totalorder %s15, 0
    %p105 = por %p103, %p104
    %s106 = ssub.s32 %s16, %s28
    %s107 = ssub.s32 %s17, %s24
    %s108 = sor.u32 %s106, %s107
    %p109 = scmp.eq.s32.totalorder %s108, 0
    %s111 = sadd.s32 %s110, 1
    %s112 = scalar_select %p109, %s110, %s111
    %p115 = pneg %p109
    %p116 = scmp.eq.s32.totalorder %s9, 1
    %p117 = por %p115, %p116
    %p118 = scmp.ne.s32.totalorder %s110, %s113
    %p119 = scmp.eq.s32.totalorder %s9, 0
    %p120 = por %p118, %p119
    %p121 = scmp.ne.s32.totalorder %s110, %s113
    %p122 = scmp.eq.s32.totalorder %s14, 1
    %p123 = por %p121, %p122
    %p124 = scmp.ne.s32.totalorder %s113, %s114
    %p125 = scmp.eq.s32.totalorder %s14, 0
    %p126 = por %p124, %p125
    %p127 = scmp.ne.s32.totalorder %s113, %s114
    %p128 = scmp.eq.s32.totalorder %s15, 1
    %p129 = por %p127, %p128
    %p131 = scmp.ne.s32.totalorder %s114, %s130
    %p132 = scmp.eq.s32.totalorder %s15, 0
    %p133 = por %p131, %p132
    %p134 = scmp.le.s32.totalorder 1, %s9
    %p135 = scmp.lt.s32.totalorder %s9, 3
    %p136 = pnand %p134, %p135
    %p137 = pneg %p136
    // Predicated region
    $region9: #{down_sample_nchw.1} parent=5 // pred_check
      _
    $region10: #{down_sample_nchw.1} parent=5 // pred_check_branch
      %139 = sbr.rel (%p136) target = $region12
    $region11: #{down_sample_nchw.1} parent=5 // pred_region
      %s140 = ssub.s32 %s9, 1
      // Predicated region
      $region13: #{down_sample_nchw.1} parent=11 // pred_check
        %p141 = pneg %p42
      $region14: #{down_sample_nchw.1} parent=11 // pred_check_branch
        %143 = sbr.rel (%p141) target = $region16
      $region15: #{down_sample_nchw.1} parent=11 // pred_region
        _
      $region16: #{down_sample_nchw.1} parent=11 // pred_fallthru
        _
    $region12: #{down_sample_nchw.1} parent=5 // pred_fallthru
      _
    %p144 = scmp.lt.s32.totalorder %s9, 2
    // Predicated region
    $region17: #{down_sample_nchw.1} parent=5 // pred_check
      %p145 = pneg %p144
    $region18: #{down_sample_nchw.1} parent=5 // pred_check_branch
      %147 = sbr.rel (%p145) target = $region20
    $region19: #{down_sample_nchw.1} parent=5 // pred_region
      // Predicated region
      $region21: #{down_sample_nchw.1} parent=19 // pred_check
        %p148 = pneg %p64
      $region22: #{down_sample_nchw.1} parent=19 // pred_check_branch
        %150 = sbr.rel (%p148) target = $region24
      $region23: #{down_sample_nchw.1} parent=19 // pred_region
        %p151 = scmp.lt.s32.totalorder %s16, 1
        %s152 = scalar_select %p151, %s16, 1
        %p153 = scmp.lt.s32.totalorder %s17, 1
        %s154 = scalar_select %p153, %s17, 1
        %s155 = smul.addr %s154, 2
        %s156 = smul.addr %s152, 4
        %s157 = sadd.s32 %s155, %s156
        %s158 = smul.addr %s157, 8
        %s159 = scalar_lea.vmem %s1, %s158
      $region24: #{down_sample_nchw.1} parent=19 // pred_fallthru
        _
      // Predicated region
      $region25: #{down_sample_nchw.1} parent=19 // pred_check
        %p160 = pneg %p92
      $region26: #{down_sample_nchw.1} parent=19 // pred_check_branch
        %162 = sbr.rel (%p160) target = $region28
      $region27: #{down_sample_nchw.1} parent=19 // pred_region
        %p163 = scmp.lt.s32.totalorder %s16, 1
        %s164 = scalar_select %p163, %s16, 1
        %p165 = scmp.lt.s32.totalorder %s17, 0
        %s166 = scalar_select %p165, %s17, 0
        %s167 = smul.addr %s166, 2
        %s168 = smul.addr %s164, 2
        %s169 = sadd.s32 %s167, %s168
        %s170 = scalar_lea.vmem %s2, %s169
      $region28: #{down_sample_nchw.1} parent=19 // pred_fallthru
        _
    $region20: #{down_sample_nchw.1} parent=5 // pred_fallthru
      _
    %p171 = scmp.le.s32.totalorder 1, %s9
    %p172 = scmp.lt.s32.totalorder %s9, 3
    %p173 = pnand %p171, %p172
    %p174 = pneg %p173
    // Predicated region
    $region29: #{down_sample_nchw.1} parent=5 // pred_check
      _
    $region30: #{down_sample_nchw.1} parent=5 // pred_check_branch
      %176 = sbr.rel (%p173) target = $region32
    $region31: #{down_sample_nchw.1} parent=5 // pred_region
      %s177 = ssub.s32 %s9, 1
      %p178 = pneg %p42
      %p179 = pneg %p39
      %p180 = scmp.lt.s32.totalorder %s18, 1
      %s181 = scalar_select %p180, %s18, 1
      %p182 = scmp.lt.s32.totalorder %s19, 1
      %s183 = scalar_select %p182, %s19, 1
      %s184 = smul.addr %s183, 2
      %s185 = smul.addr %s181, 4
      %s186 = sadd.s32 %s184, %s185
      %s187 = smul.addr %s186, 8
      %s188 = scalar_lea.vmem %s1, %s187
      %p189 = pneg %p70
      %p190 = pneg %p67
      %p191 = scmp.lt.s32.totalorder %s18, 1
      %s192 = scalar_select %p191, %s18, 1
      %p193 = scmp.lt.s32.totalorder %s19, 0
      %s194 = scalar_select %p193, %s19, 0
      %s195 = smul.addr %s194, 2
      %s196 = smul.addr %s192, 2
      %s197 = sadd.s32 %s195, %s196
      %s198 = scalar_lea.vmem %s2, %s197
      %p199 = pneg %p98
      %p200 = pneg %p95
      %p201 = pneg %p126
      %p202 = pneg %p123
      %p203 = scmp.lt.s32.totalorder %s18, 1
      %s204 = scalar_select %p203, %s18, 1
      %p205 = scmp.lt.s32.totalorder %s19, 0
      %s206 = scalar_select %p205, %s19, 0
      %s207 = sadd.s32 %s206, %s204
      %s208 = smul.addr %s207, 8
      %s209 = scalar_lea.vmem %s3, %s208
      %p210 = scmp.lt.s32.totalorder %s18, 1
      %s211 = scalar_select %p210, %s18, 1
      %p212 = scmp.lt.s32.totalorder %s19, 1
      %s213 = scalar_select %p212, %s19, 1
      %s214 = smul.addr %s213, 2
      %s215 = smul.addr %s211, 4
      %s216 = sadd.s32 %s214, %s215
      %s217 = smul.addr %s216, 8
      %s218 = scalar_lea.vmem %s1, %s217
      %p219 = scmp.lt.s32.totalorder %s18, 1
      %s220 = scalar_select %p219, %s18, 1
      %p221 = scmp.lt.s32.totalorder %s19, 0
      %s222 = scalar_select %p221, %s19, 0
      %s223 = smul.addr %s222, 2
      %s224 = smul.addr %s220, 2
      %s225 = sadd.s32 %s223, %s224
      %s226 = scalar_lea.vmem %s2, %s225
      %p227 = scmp.lt.s32.totalorder %s18, 1
      %s228 = scalar_select %p227, %s18, 1
      %p229 = scmp.lt.s32.totalorder %s19, 0
      %s230 = scalar_select %p229, %s19, 0
      %s231 = sadd.s32 %s230, %s228
      %s232 = smul.addr %s231, 8
      %s233 = scalar_lea.vmem %s3, %s232
      %v234 = vld [vmem:[%s218] sm:$0xff]
      %v235 = vld [vmem:[%s218 + $0x8] sm:$0xff]
      %v236 = vld [vmem:[%s226] sm:$0x3]
      %v238 = vrot.slane %v234, 1
      %v241 = vperm.slane %v236, 0
      %vm243 = vcmask 1046528
      %v244 = vsel %vm243, %v238, %v241
      %v245 = vld [vmem:[%s0] sm:$0x1]
      %s246 = scalar_lea.vmem %s0, 16
      %v247 = vld [vmem:[%s246] sm:$0x1]
      %s248 = scalar_lea.vmem %s0, 32
      %v249 = vld [vmem:[%s248] sm:$0x1]
      %v250 = vperm.slane %v245, 0
      %252 = vrot.lane.b32.xlu0 %v250, 1
      %v253 = vpop.permute.xlu0 %252
      %v255 = vmul.f32 %v234, %v253
      %v256 = vadd.f32 %v255, 0.0
      %v257 = vperm.slane %v247, 0
      %259 = vrot.lane.b32.xlu0 %v257, 81
      %v260 = vpop.permute.xlu0 %259
      %v262 = vmul.f32 %v234, %v260
      %v263 = vmul.f32 %v235, %v260
      %266 = vrot.lane.b32.xlu0 %v262, 48
      %v267 = vpop.permute.xlu0 %266
      %268 = vrot.lane.b32.xlu0 %v263, 48
      %v269 = vpop.permute.xlu0 %268
      %vm270 = vcmask 392192
      %v271 = vsel %vm270, %v267, %v269
      %v273 = vadd.f32 %v256, %v271
      %v274 = vperm.slane %v249, 0
      %276 = vrot.lane.b32.xlu0 %v274, 1
      %v277 = vpop.permute.xlu0 %276
      %v279 = vmul.f32 %v244, %v277
      %v280 = vadd.f32 %v273, %v279
      %v281 = vld [vmem:[%s0 + $0x1] sm:$0x1]
      %v282 = vld [vmem:[%s246 + $0x1] sm:$0x1]
      %v283 = vld [vmem:[%s248 + $0x1] sm:$0x1]
      %v284 = vperm.slane %v281, 0
      %286 = vrot.lane.b32.xlu0 %v284, 2
      %v287 = vpop.permute.xlu0 %286
      %v289 = vmul.f32 %v234, %v287
      %291 = vrot.lane.b32.xlu0 %v289, 127
      %v292 = vpop.permute.xlu0 %291
      %v294 = vadd.f32 %v280, %v292
      %v295 = vperm.slane %v282, 0
      %297 = vrot.lane.b32.xlu0 %v295, 82
      %v298 = vpop.permute.xlu0 %297
      %v300 = vmul.f32 %v234, %v298
      %v301 = vmul.f32 %v235, %v298
      %304 = vrot.lane.b32.xlu0 %v300, 47
      %v305 = vpop.permute.xlu0 %304
      %306 = vrot.lane.b32.xlu0 %v301, 47
      %v307 = vpop.permute.xlu0 %306
      %vm308 = vcmask 384000
      %v309 = vsel %vm308, %v305, %v307
      %v311 = vadd.f32 %v294, %v309
      %v312 = vperm.slane %v283, 0
      %314 = vrot.lane.b32.xlu0 %v312, 2
      %v315 = vpop.permute.xlu0 %314
      %v317 = vmul.f32 %v244, %v315
      %319 = vrot.lane.b32.xlu0 %v317, 127
      %v320 = vpop.permute.xlu0 %319
      %v322 = vadd.f32 %v311, %v320
      %v323 = vld [vmem:[%s0 + $0x2] sm:$0x1]
      %v324 = vld [vmem:[%s246 + $0x2] sm:$0x1]
      %v325 = vld [vmem:[%s248 + $0x2] sm:$0x1]
      %v326 = vperm.slane %v323, 0
      %328 = vrot.lane.b32.xlu0 %v326, 3
      %v329 = vpop.permute.xlu0 %328
      %v331 = vmul.f32 %v234, %v329
      %333 = vrot.lane.b32.xlu0 %v331, 126
      %v334 = vpop.permute.xlu0 %333
      %v336 = vadd.f32 %v322, %v334
      %v337 = vperm.slane %v324, 0
      %339 = vrot.lane.b32.xlu0 %v337, 83
      %v340 = vpop.permute.xlu0 %339
      %v342 = vmul.f32 %v234, %v340
      %v343 = vmul.f32 %v235, %v340
      %346 = vrot.lane.b32.xlu0 %v342, 46
      %v347 = vpop.permute.xlu0 %346
      %348 = vrot.lane.b32.xlu0 %v343, 46
      %v349 = vpop.permute.xlu0 %348
      %vm350 = vcmask 375808
      %v351 = vsel %vm350, %v347, %v349
      %v353 = vadd.f32 %v336, %v351
      %v354 = vperm.slane %v325, 0
      %356 = vrot.lane.b32.xlu0 %v354, 3
      %v357 = vpop.permute.xlu0 %356
      %v359 = vmul.f32 %v244, %v357
      %361 = vrot.lane.b32.xlu0 %v359, 126
      %v362 = vpop.permute.xlu0 %361
      %v364 = vadd.f32 %v353, %v362
      %v365 = vld [vmem:[%s0 + $0x3] sm:$0x1]
      %v366 = vld [vmem:[%s246 + $0x3] sm:$0x1]
      %v367 = vld [vmem:[%s248 + $0x3] sm:$0x1]
      %v368 = vperm.slane %v365, 0
      %370 = vrot.lane.b32.xlu0 %v368, 4
      %v371 = vpop.permute.xlu0 %370
      %v373 = vmul.f32 %v234, %v371
      %375 = vrot.lane.b32.xlu0 %v373, 125
      %v376 = vpop.permute.xlu0 %375
      %v378 = vadd.f32 %v364, %v376
      %v379 = vperm.slane %v366, 0
      %381 = vrot.lane.b32.xlu0 %v379, 84
      %v382 = vpop.permute.xlu0 %381
      %v384 = vmul.f32 %v234, %v382
      %v385 = vmul.f32 %v235, %v382
      %388 = vrot.lane.b32.xlu0 %v384, 45
      %v389 = vpop.permute.xlu0 %388
      %390 = vrot.lane.b32.xlu0 %v385, 45
      %v391 = vpop.permute.xlu0 %390
      %vm392 = vcmask 367616
      %v393 = vsel %vm392, %v389, %v391
      %v395 = vadd.f32 %v378, %v393
      %v396 = vperm.slane %v367, 0
      %398 = vrot.lane.b32.xlu0 %v396, 4
      %v399 = vpop.permute.xlu0 %398
      %v401 = vmul.f32 %v244, %v399
      %403 = vrot.lane.b32.xlu0 %v401, 125
      %v404 = vpop.permute.xlu0 %403
      %v406 = vadd.f32 %v395, %v404
      %v407 = vld [vmem:[%s0 + $0x4] sm:$0x1]
      %v408 = vld [vmem:[%s246 + $0x4] sm:$0x1]
      %v409 = vld [vmem:[%s248 + $0x4] sm:$0x1]
      %v410 = vperm.slane %v407, 0
      %412 = vrot.lane.b32.xlu0 %v410, 5
      %v413 = vpop.permute.xlu0 %412
      %v415 = vmul.f32 %v234, %v413
      %417 = vrot.lane.b32.xlu0 %v415, 124
      %v418 = vpop.permute.xlu0 %417
      %v420 = vadd.f32 %v406, %v418
      %v421 = vperm.slane %v408, 0
      %423 = vrot.lane.b32.xlu0 %v421, 85
      %v424 = vpop.permute.xlu0 %423
      %v426 = vmul.f32 %v234, %v424
      %v427 = vmul.f32 %v235, %v424
      %430 = vrot.lane.b32.xlu0 %v426, 44
      %v431 = vpop.permute.xlu0 %430
      %432 = vrot.lane.b32.xlu0 %v427, 44
      %v433 = vpop.permute.xlu0 %432
      %vm434 = vcmask 359424
      %v435 = vsel %vm434, %v431, %v433
      %v437 = vadd.f32 %v420, %v435
      %v438 = vperm.slane %v409, 0
      %440 = vrot.lane.b32.xlu0 %v438, 5
      %v441 = vpop.permute.xlu0 %440
      %v443 = vmul.f32 %v244, %v441
      %445 = vrot.lane.b32.xlu0 %v443, 124
      %v446 = vpop.permute.xlu0 %445
      %v448 = vadd.f32 %v437, %v446
      %v449 = vld [vmem:[%s0 + $0x5] sm:$0x1]
      %v450 = vld [vmem:[%s246 + $0x5] sm:$0x1]
      %v451 = vld [vmem:[%s248 + $0x5] sm:$0x1]
      %v452 = vperm.slane %v449, 0
      %454 = vrot.lane.b32.xlu0 %v452, 6
      %v455 = vpop.permute.xlu0 %454
      %v457 = vmul.f32 %v234, %v455
      %459 = vrot.lane.b32.xlu0 %v457, 123
      %v460 = vpop.permute.xlu0 %459
      %v462 = vadd.f32 %v448, %v460
      %v463 = vperm.slane %v450, 0
      %465 = vrot.lane.b32.xlu0 %v463, 86
      %v466 = vpop.permute.xlu0 %465
      %v468 = vmul.f32 %v234, %v466
      %v469 = vmul.f32 %v235, %v466
      %472 = vrot.lane.b32.xlu0 %v468, 43
      %v473 = vpop.permute.xlu0 %472
      %474 = vrot.lane.b32.xlu0 %v469, 43
      %v475 = vpop.permute.xlu0 %474
      %vm476 = vcmask 351232
      %v477 = vsel %vm476, %v473, %v475
      %v479 = vadd.f32 %v462, %v477
      %v480 = vperm.slane %v451, 0
      %482 = vrot.lane.b32.xlu0 %v480, 6
      %v483 = vpop.permute.xlu0 %482
      %v485 = vmul.f32 %v244, %v483
      %487 = vrot.lane.b32.xlu0 %v485, 123
      %v488 = vpop.permute.xlu0 %487
      %v490 = vadd.f32 %v479, %v488
      %v491 = vld [vmem:[%s0 + $0x6] sm:$0x1]
      %v492 = vld [vmem:[%s246 + $0x6] sm:$0x1]
      %v493 = vld [vmem:[%s248 + $0x6] sm:$0x1]
      %v494 = vperm.slane %v491, 0
      %496 = vrot.lane.b32.xlu0 %v494, 7
      %v497 = vpop.permute.xlu0 %496
      %v499 = vmul.f32 %v234, %v497
      %501 = vrot.lane.b32.xlu0 %v499, 122
      %v502 = vpop.permute.xlu0 %501
      %v504 = vadd.f32 %v490, %v502
      %v505 = vperm.slane %v492, 0
      %507 = vrot.lane.b32.xlu0 %v505, 87
      %v508 = vpop.permute.xlu0 %507
      %v510 = vmul.f32 %v234, %v508
      %v511 = vmul.f32 %v235, %v508
      %514 = vrot.lane.b32.xlu0 %v510, 42
      %v515 = vpop.permute.xlu0 %514
      %516 = vrot.lane.b32.xlu0 %v511, 42
      %v517 = vpop.permute.xlu0 %516
      %vm518 = vcmask 343040
      %v519 = vsel %vm518, %v515, %v517
      %v521 = vadd.f32 %v504, %v519
      %v522 = vperm.slane %v493, 0
      %524 = vrot.lane.b32.xlu0 %v522, 7
      %v525 = vpop.permute.xlu0 %524
      %v527 = vmul.f32 %v244, %v525
      %529 = vrot.lane.b32.xlu0 %v527, 122
      %v530 = vpop.permute.xlu0 %529
      %v532 = vadd.f32 %v521, %v530
      %v533 = vld [vmem:[%s0 + $0x7] sm:$0x1]
      %v534 = vld [vmem:[%s246 + $0x7] sm:$0x1]
      %v535 = vld [vmem:[%s248 + $0x7] sm:$0x1]
      %v536 = vperm.slane %v533, 0
      %538 = vrot.lane.b32.xlu0 %v536, 8
      %v539 = vpop.permute.xlu0 %538
      %v541 = vmul.f32 %v234, %v539
      %543 = vrot.lane.b32.xlu0 %v541, 121
      %v544 = vpop.permute.xlu0 %543
      %v546 = vadd.f32 %v532, %v544
      %v547 = vperm.slane %v534, 0
      %549 = vrot.lane.b32.xlu0 %v547, 88
      %v550 = vpop.permute.xlu0 %549
      %v552 = vmul.f32 %v234, %v550
      %v553 = vmul.f32 %v235, %v550
      %556 = vrot.lane.b32.xlu0 %v552, 41
      %v557 = vpop.permute.xlu0 %556
      %558 = vrot.lane.b32.xlu0 %v553, 41
      %v559 = vpop.permute.xlu0 %558
      %vm560 = vcmask 334848
      %v561 = vsel %vm560, %v557, %v559
      %v563 = vadd.f32 %v546, %v561
      %v564 = vperm.slane %v535, 0
      %566 = vrot.lane.b32.xlu0 %v564, 8
      %v567 = vpop.permute.xlu0 %566
      %v569 = vmul.f32 %v244, %v567
      %571 = vrot.lane.b32.xlu0 %v569, 121
      %v572 = vpop.permute.xlu0 %571
      %v574 = vadd.f32 %v563, %v572
      %v575 = vld [vmem:[%s0 + $0x8] sm:$0x1]
      %v576 = vld [vmem:[%s246 + $0x8] sm:$0x1]
      %v577 = vld [vmem:[%s248 + $0x8] sm:$0x1]
      %v578 = vperm.slane %v575, 0
      %580 = vrot.lane.b32.xlu0 %v578, 9
      %v581 = vpop.permute.xlu0 %580
      %v583 = vmul.f32 %v234, %v581
      %585 = vrot.lane.b32.xlu0 %v583, 120
      %v586 = vpop.permute.xlu0 %585
      %v588 = vadd.f32 %v574, %v586
      %v589 = vperm.slane %v576, 0
      %591 = vrot.lane.b32.xlu0 %v589, 89
      %v592 = vpop.permute.xlu0 %591
      %v594 = vmul.f32 %v234, %v592
      %v595 = vmul.f32 %v235, %v592
      %598 = vrot.lane.b32.xlu0 %v594, 40
      %v599 = vpop.permute.xlu0 %598
      %600 = vrot.lane.b32.xlu0 %v595, 40
      %v601 = vpop.permute.xlu0 %600
      %vm602 = vcmask 326656
      %v603 = vsel %vm602, %v599, %v601
      %v605 = vadd.f32 %v588, %v603
      %v606 = vperm.slane %v577, 0
      %608 = vrot.lane.b32.xlu0 %v606, 9
      %v609 = vpop.permute.xlu0 %608
      %v611 = vmul.f32 %v244, %v609
      %613 = vrot.lane.b32.xlu0 %v611, 120
      %v614 = vpop.permute.xlu0 %613
      %v616 = vadd.f32 %v605, %v614
      %v617 = vld [vmem:[%s0 + $0x9] sm:$0x1]
      %v618 = vld [vmem:[%s246 + $0x9] sm:$0x1]
      %v619 = vld [vmem:[%s248 + $0x9] sm:$0x1]
      %v620 = vperm.slane %v617, 0
      %622 = vrot.lane.b32.xlu0 %v620, 10
      %v623 = vpop.permute.xlu0 %622
      %v625 = vmul.f32 %v234, %v623
      %627 = vrot.lane.b32.xlu0 %v625, 119
      %v628 = vpop.permute.xlu0 %627
      %v630 = vadd.f32 %v616, %v628
      %v631 = vperm.slane %v618, 0
      %633 = vrot.lane.b32.xlu0 %v631, 90
      %v634 = vpop.permute.xlu0 %633
      %v636 = vmul.f32 %v234, %v634
      %v637 = vmul.f32 %v235, %v634
      %640 = vrot.lane.b32.xlu0 %v636, 39
      %v641 = vpop.permute.xlu0 %640
      %642 = vrot.lane.b32.xlu0 %v637, 39
      %v643 = vpop.permute.xlu0 %642
      %vm644 = vcmask 318464
      %v645 = vsel %vm644, %v641, %v643
      %v647 = vadd.f32 %v630, %v645
      %v648 = vperm.slane %v619, 0
      %650 = vrot.lane.b32.xlu0 %v648, 10
      %v651 = vpop.permute.xlu0 %650
      %v653 = vmul.f32 %v244, %v651
      %655 = vrot.lane.b32.xlu0 %v653, 119
      %v656 = vpop.permute.xlu0 %655
      %v658 = vadd.f32 %v647, %v656
      %v659 = vld [vmem:[%s0 + $0xa] sm:$0x1]
      %v660 = vld [vmem:[%s246 + $0xa] sm:$0x1]
      %v661 = vld [vmem:[%s248 + $0xa] sm:$0x1]
      %v662 = vperm.slane %v659, 0
      %664 = vrot.lane.b32.xlu0 %v662, 11
      %v665 = vpop.permute.xlu0 %664
      %v667 = vmul.f32 %v234, %v665
      %669 = vrot.lane.b32.xlu0 %v667, 118
      %v670 = vpop.permute.xlu0 %669
      %v672 = vadd.f32 %v658, %v670
      %v673 = vperm.slane %v660, 0
      %675 = vrot.lane.b32.xlu0 %v673, 91
      %v676 = vpop.permute.xlu0 %675
      %v678 = vmul.f32 %v234, %v676
      %v679 = vmul.f32 %v235, %v676
      %682 = vrot.lane.b32.xlu0 %v678, 38
      %v683 = vpop.permute.xlu0 %682
      %684 = vrot.lane.b32.xlu0 %v679, 38
      %v685 = vpop.permute.xlu0 %684
      %vm686 = vcmask 310272
      %v687 = vsel %vm686, %v683, %v685
      %v689 = vadd.f32 %v672, %v687
      %v690 = vperm.slane %v661, 0
      %692 = vrot.lane.b32.xlu0 %v690, 11
      %v693 = vpop.permute.xlu0 %692
      %v695 = vmul.f32 %v244, %v693
      %697 = vrot.lane.b32.xlu0 %v695, 118
      %v698 = vpop.permute.xlu0 %697
      %v700 = vadd.f32 %v689, %v698
      %v701 = vld [vmem:[%s0 + $0xb] sm:$0x1]
      %v702 = vld [vmem:[%s246 + $0xb] sm:$0x1]
      %v703 = vld [vmem:[%s248 + $0xb] sm:$0x1]
      %v704 = vperm.slane %v701, 0
      %706 = vrot.lane.b32.xlu0 %v704, 12
      %v707 = vpop.permute.xlu0 %706
      %v709 = vmul.f32 %v234, %v707
      %711 = vrot.lane.b32.xlu0 %v709, 117
      %v712 = vpop.permute.xlu0 %711
      %v714 = vadd.f32 %v700, %v712
      %v715 = vperm.slane %v702, 0
      %717 = vrot.lane.b32.xlu0 %v715, 92
      %v718 = vpop.permute.xlu0 %717
      %v720 = vmul.f32 %v234, %v718
      %v721 = vmul.f32 %v235, %v718
      %724 = vrot.lane.b32.xlu0 %v720, 37
      %v725 = vpop.permute.xlu0 %724
      %726 = vrot.lane.b32.xlu0 %v721, 37
      %v727 = vpop.permute.xlu0 %726
      %vm728 = vcmask 302080
      %v729 = vsel %vm728, %v725, %v727
      %v731 = vadd.f32 %v714, %v729
      %v732 = vperm.slane %v703, 0
      %734 = vrot.lane.b32.xlu0 %v732, 12
      %v735 = vpop.permute.xlu0 %734
      %v737 = vmul.f32 %v244, %v735
      %739 = vrot.lane.b32.xlu0 %v737, 117
      %v740 = vpop.permute.xlu0 %739
      %v742 = vadd.f32 %v731, %v740
      %v743 = vld [vmem:[%s0 + $0xc] sm:$0x1]
      %v744 = vld [vmem:[%s246 + $0xc] sm:$0x1]
      %v745 = vld [vmem:[%s248 + $0xc] sm:$0x1]
      %v746 = vperm.slane %v743, 0
      %748 = vrot.lane.b32.xlu0 %v746, 13
      %v749 = vpop.permute.xlu0 %748
      %v751 = vmul.f32 %v234, %v749
      %753 = vrot.lane.b32.xlu0 %v751, 116
      %v754 = vpop.permute.xlu0 %753
      %v756 = vadd.f32 %v742, %v754
      %v757 = vperm.slane %v744, 0
      %759 = vrot.lane.b32.xlu0 %v757, 93
      %v760 = vpop.permute.xlu0 %759
      %v762 = vmul.f32 %v234, %v760
      %v763 = vmul.f32 %v235, %v760
      %766 = vrot.lane.b32.xlu0 %v762, 36
      %v767 = vpop.permute.xlu0 %766
      %768 = vrot.lane.b32.xlu0 %v763, 36
      %v769 = vpop.permute.xlu0 %768
      %vm770 = vcmask 293888
      %v771 = vsel %vm770, %v767, %v769
      %v773 = vadd.f32 %v756, %v771
      %v774 = vperm.slane %v745, 0
      %776 = vrot.lane.b32.xlu0 %v774, 13
      %v777 = vpop.permute.xlu0 %776
      %v779 = vmul.f32 %v244, %v777
      %781 = vrot.lane.b32.xlu0 %v779, 116
      %v782 = vpop.permute.xlu0 %781
      %v784 = vadd.f32 %v773, %v782
      %v785 = vld [vmem:[%s0 + $0xd] sm:$0x1]
      %v786 = vld [vmem:[%s246 + $0xd] sm:$0x1]
      %v787 = vld [vmem:[%s248 + $0xd] sm:$0x1]
      %v788 = vperm.slane %v785, 0
      %790 = vrot.lane.b32.xlu0 %v788, 14
      %v791 = vpop.permute.xlu0 %790
      %v793 = vmul.f32 %v234, %v791
      %795 = vrot.lane.b32.xlu0 %v793, 115
      %v796 = vpop.permute.xlu0 %795
      %v798 = vadd.f32 %v784, %v796
      %v799 = vperm.slane %v786, 0
      %801 = vrot.lane.b32.xlu0 %v799, 94
      %v802 = vpop.permute.xlu0 %801
      %v804 = vmul.f32 %v234, %v802
      %v805 = vmul.f32 %v235, %v802
      %808 = vrot.lane.b32.xlu0 %v804, 35
      %v809 = vpop.permute.xlu0 %808
      %810 = vrot.lane.b32.xlu0 %v805, 35
      %v811 = vpop.permute.xlu0 %810
      %vm812 = vcmask 285696
      %v813 = vsel %vm812, %v809, %v811
      %v815 = vadd.f32 %v798, %v813
      %v816 = vperm.slane %v787, 0
      %818 = vrot.lane.b32.xlu0 %v816, 14
      %v819 = vpop.permute.xlu0 %818
      %v821 = vmul.f32 %v244, %v819
      %823 = vrot.lane.b32.xlu0 %v821, 115
      %v824 = vpop.permute.xlu0 %823
      %v826 = vadd.f32 %v815, %v824
      %v827 = vld [vmem:[%s0 + $0xe] sm:$0x1]
      %v828 = vld [vmem:[%s246 + $0xe] sm:$0x1]
      %v829 = vld [vmem:[%s248 + $0xe] sm:$0x1]
      %v830 = vperm.slane %v827, 0
      %832 = vrot.lane.b32.xlu0 %v830, 15
      %v833 = vpop.permute.xlu0 %832
      %v835 = vmul.f32 %v234, %v833
      %837 = vrot.lane.b32.xlu0 %v835, 114
      %v838 = vpop.permute.xlu0 %837
      %v840 = vadd.f32 %v826, %v838
      %v841 = vperm.slane %v828, 0
      %843 = vrot.lane.b32.xlu0 %v841, 95
      %v844 = vpop.permute.xlu0 %843
      %v846 = vmul.f32 %v234, %v844
      %v847 = vmul.f32 %v235, %v844
      %850 = vrot.lane.b32.xlu0 %v846, 34
      %v851 = vpop.permute.xlu0 %850
      %852 = vrot.lane.b32.xlu0 %v847, 34
      %v853 = vpop.permute.xlu0 %852
      %vm854 = vcmask 277504
      %v855 = vsel %vm854, %v851, %v853
      %v857 = vadd.f32 %v840, %v855
      %v858 = vperm.slane %v829, 0
      %860 = vrot.lane.b32.xlu0 %v858, 15
      %v861 = vpop.permute.xlu0 %860
      %v863 = vmul.f32 %v244, %v861
      %865 = vrot.lane.b32.xlu0 %v863, 114
      %v866 = vpop.permute.xlu0 %865
      %v868 = vadd.f32 %v857, %v866
      %vm869 = vcmp.ge.f32.partialorder %v868, 0.0
      %v870 = vmul.f32 %v868, 0.01
      %v871 = vsel %vm869, %v868, %v870
      %873 = vrot.lane.b32.xlu0 %v871, 127
      %v874 = vpop.permute.xlu0 %873
      %vm876 = vcmask 523264
      %877 = vst.msk [vmem:[%s233] sm:$0xff] %vm876, %v874
      %p878 = scmp.lt.s32.totalorder %s18, 1
      %s879 = scalar_select %p878, %s18, 1
      %p880 = scmp.lt.s32.totalorder %s19, 0
      %s881 = scalar_select %p880, %s19, 0
      %s882 = sadd.s32 %s881, %s879
      %s883 = smul.addr %s882, 8
      %s884 = scalar_lea.vmem %s3, %s883
      // Predicated region
      $region33: #{down_sample_nchw.1} parent=31 // pred_check
        %p885 = pneg %p123
      $region34: #{down_sample_nchw.1} parent=31 // pred_check_branch
        %887 = sbr.rel (%p885) target = $region36
      $region35: #{down_sample_nchw.1} parent=31 // pred_region
        _
      $region36: #{down_sample_nchw.1} parent=31 // pred_fallthru
        _
    $region32: #{down_sample_nchw.1} parent=5 // pred_fallthru
      _
    %p888 = scmp.le.s32.totalorder 2, %s9
    // Predicated region
    $region37: #{down_sample_nchw.1} parent=5 // pred_check
      %p889 = pneg %p888
    $region38: #{down_sample_nchw.1} parent=5 // pred_check_branch
      %891 = sbr.rel (%p889) target = $region40
    $region39: #{down_sample_nchw.1} parent=5 // pred_region
      %s892 = ssub.s32 %s9, 2
      // Predicated region
      $region41: #{down_sample_nchw.1} parent=39 // pred_check
        %p893 = pneg %p129
      $region42: #{down_sample_nchw.1} parent=39 // pred_check_branch
        %895 = sbr.rel (%p893) target = $region44
      $region43: #{down_sample_nchw.1} parent=39 // pred_region
        %p896 = scmp.lt.s32.totalorder %s20, 1
        %s897 = scalar_select %p896, %s20, 1
        %p898 = scmp.lt.s32.totalorder %s21, 0
        %s899 = scalar_select %p898, %s21, 0
        %s900 = sadd.s32 %s899, %s897
        %s901 = smul.addr %s900, 8
        %s902 = scalar_lea.vmem %s3, %s901
      $region44: #{down_sample_nchw.1} parent=39 // pred_fallthru
        _
    $region40: #{down_sample_nchw.1} parent=5 // pred_fallthru
      _
  $region6: #{down_sample_nchw.1} parent=0 // loop_footer
    %s13 = sadd.s32 1, %s9
  $region7: #{down_sample_nchw.1} parent=0 // loop_footer_branch
    %8 = sbr.rel target = $region3
  $region8: #{down_sample_nchw.1} parent=0 // loop_exit
    _

</llo_original>
